<compile_context>
chip_gen: v5e
topology: v5e:2x2
jax: 0.10.0
libtpu: 0.0.40
codegen_flags: <defaults>
</compile_context>

<pallas_src>
import jax
import jax.numpy as jnp
from jax.experimental import pallas as pl
from jax.experimental.pallas import tpu as pltpu


def _videomae_output_kernel(x_ref, wt_ref, b_ref, res_ref, o_ref):
    # x_ref:   (tm, I)  matmul-dtype hidden_states tile
    # wt_ref:  (I,  H)  matmul-dtype dense weight, pre-transposed (resident)
    # b_ref:   (1,  H)  f32 dense bias (resident)
    # res_ref: (tm, H)  residual (input_tensor) tile
    # o_ref:   (tm, H)  output tile
    y = jnp.dot(x_ref[...], wt_ref[...], preferred_element_type=jnp.float32)
    y = y + b_ref[...] + res_ref[...].astype(jnp.float32)
    o_ref[...] = y.astype(o_ref.dtype)


def _round_up(x, m):
    return ((x + m - 1) // m) * m


def videomae_output(hidden_states, input_tensor, weight, bias, *,
                    tm=512, matmul_dtype=jnp.bfloat16, io_dtype=None,
                    vmem_limit_bytes=48 * 1024 * 1024):
    """hidden_states: (B, S, I); input_tensor: (B, S, H);
       weight: (H, I) as in nn.Linear; bias: (H,).

       io_dtype: optional streaming dtype for residual/output (e.g. bf16 on
       v6e to cut HBM traffic); None keeps input_tensor.dtype."""
    B, S, I = hidden_states.shape
    H = input_tensor.shape[-1]
    M = B * S
    out_dtype = io_dtype if io_dtype is not None else input_tensor.dtype

    # Row tile: big for MXU / HBM roofline, clamped for small inputs, always a
    # multiple of 8 (sublane). No padding: the ragged last block is masked.
    tm = max(8, min(tm, _round_up(M, 8)))
    n_blocks = pl.cdiv(M, tm)

    # One-time operand prep (outside the grid loop). Conditional casts avoid a
    # redundant full-activation HBM pass when the model already runs bf16.
    x2d = hidden_states.reshape(M, I)
    if x2d.dtype != matmul_dtype:
        x2d = x2d.astype(matmul_dtype)
    w_t = weight.T                                    # (I, H), one-time transpose
    if w_t.dtype != matmul_dtype:
        w_t = w_t.astype(matmul_dtype)
    b2d = bias.astype(jnp.float32).reshape(1, H)
    r2d = input_tensor.reshape(M, H)
    if io_dtype is not None and r2d.dtype != io_dtype:
        r2d = r2d.astype(io_dtype)

    cost = pl.CostEstimate(
        flops=2 * M * I * H,
        transcendentals=0,
        bytes_accessed=(M * I * x2d.dtype.itemsize
                        + I * H * w_t.dtype.itemsize
                        + H * 4
                        + M * H * r2d.dtype.itemsize
                        + M * H * jnp.dtype(out_dtype).itemsize))

    def build(single_buffer_resident):
        resident_kwargs = (
            dict(pipeline_mode=pl.Buffered(1)) if single_buffer_resident else {})
        in_specs = [
            pl.BlockSpec((tm, I), lambda i: (i, 0)),                     # x tile
            pl.BlockSpec((I, H), lambda i: (0, 0), **resident_kwargs),   # w.T
            pl.BlockSpec((1, H), lambda i: (0, 0), **resident_kwargs),   # bias
            pl.BlockSpec((tm, H), lambda i: (i, 0)),                     # residual
        ]
        return pl.pallas_call(
            _videomae_output_kernel,
            out_shape=jax.ShapeDtypeStruct((M, H), out_dtype),
            grid_spec=pltpu.PrefetchScalarGridSpec(
                num_scalar_prefetch=0,
                grid=(n_blocks,),
                in_specs=in_specs,
                out_specs=pl.BlockSpec((tm, H), lambda i: (i, 0)),
            ),
            compiler_params=pltpu.CompilerParams(
                dimension_semantics=("parallel",),
                vmem_limit_bytes=vmem_limit_bytes),
            cost_estimate=cost,
        )

    try:
        out2d = build(True)(x2d, w_t, b2d, r2d)
    except Exception:
        # pipeline_mode / Buffered(1) not supported by this JAX version:
        # fall back to default (double-buffered) pipelining of the weight/bias.
        out2d = build(False)(x2d, w_t, b2d, r2d)

    return out2d.reshape(B, S, H)


if __name__ == "__main__":
    # Small config: batch=2, seq=8, hidden_size=32, intermediate_size=128
    B, S, H, I = 2, 8, 32, 128

    key = jax.random.PRNGKey(0)
    k_hs, k_res, k_w, k_b = jax.random.split(key, 4)

    hidden_states = jax.random.normal(k_hs, (B, S, I), dtype=jnp.float32)
    input_tensor = jax.random.normal(k_res, (B, S, H), dtype=jnp.float32)
    # Deterministic "Linear" parameter init (synthetic, not a checkpoint load).
    weight = jax.random.normal(k_w, (H, I), dtype=jnp.float32) * 0.02
    bias = jax.random.normal(k_b, (H,), dtype=jnp.float32) * 0.02

    out = videomae_output(hidden_states, input_tensor, weight, bias)
    out = jax.block_until_ready(out)

    # Reference in plain JAX with the same bf16-operand / f32-accumulate recipe.
    ref = jnp.dot(hidden_states.reshape(-1, I).astype(jnp.bfloat16),
                  weight.astype(jnp.bfloat16).T,
                  preferred_element_type=jnp.float32)
    ref = (ref + bias).reshape(B, S, H) + input_tensor

    assert out.shape == (B, S, H)
    assert out.dtype == input_tensor.dtype
    assert jnp.allclose(out, ref, atol=1e-3, rtol=1e-3), "mismatch vs reference"

    print("KERNEL_OK")
</pallas_src>

<mosaic_0001>
module attributes {stable_mosaic.version = 11 : i64} {
  func.func @_videomae_output_kernel(%arg0: i32, %arg1: memref<16x128xbf16, #tpu.memory_space<vmem>>, %arg2: memref<128x32xbf16, #tpu.memory_space<vmem>>, %arg3: memref<1x32xf32, #tpu.memory_space<vmem>>, %arg4: memref<16x32xf32, #tpu.memory_space<vmem>>, %arg5: memref<16x32xf32, #tpu.memory_space<vmem>>) attributes {dimension_semantics = [#tpu.dimension_semantics<parallel>], iteration_bounds = array<i64: 1>, scalar_prefetch = 0 : i64, scratch_operands = 0 : i64, tpu.core_type = #tpu.core_type<tc>, window_params = [{transform_indices = @transform_0, window_bounds = array<i64: 16, 128>}, {pipeline_mode = #tpu.pipeline_mode<synchronous>, transform_indices = @transform_1, window_bounds = array<i64: 128, 32>}, {pipeline_mode = #tpu.pipeline_mode<synchronous>, transform_indices = @transform_2, window_bounds = array<i64: 1, 32>}, {transform_indices = @transform_3, window_bounds = array<i64: 16, 32>}, {transform_indices = @transform_4, window_bounds = array<i64: 16, 32>}]} {
    %c0 = arith.constant 0 : index
    %c0_0 = arith.constant 0 : index
    %0 = vector.load %arg1[%c0, %c0_0] : memref<16x128xbf16, #tpu.memory_space<vmem>>, vector<16x128xbf16>
    %c0_1 = arith.constant 0 : index
    %c0_2 = arith.constant 0 : index
    %1 = vector.load %arg2[%c0_1, %c0_2] : memref<128x32xbf16, #tpu.memory_space<vmem>>, vector<128x32xbf16>
    %cst = arith.constant dense<0.000000e+00> : vector<16x32xf32>
    %2 = tpu.matmul %0, %1, %cst {dimension_numbers = #tpu.dot_dimension_numbers<[1], [0], [0], [1], [0, 0, 1, 1], [], []>} : vector<16x128xbf16>, vector<128x32xbf16>, vector<16x32xf32> -> vector<16x32xf32>
    %c0_3 = arith.constant 0 : index
    %c0_4 = arith.constant 0 : index
    %3 = vector.load %arg3[%c0_3, %c0_4] : memref<1x32xf32, #tpu.memory_space<vmem>>, vector<1x32xf32>
    %4 = vector.broadcast %3 : vector<1x32xf32> to vector<16x32xf32>
    %5 = arith.addf %2, %4 : vector<16x32xf32>
    %c0_5 = arith.constant 0 : index
    %c0_6 = arith.constant 0 : index
    %6 = vector.load %arg4[%c0_5, %c0_6] : memref<16x32xf32, #tpu.memory_space<vmem>>, vector<16x32xf32>
    %7 = arith.addf %5, %6 : vector<16x32xf32>
    %c0_7 = arith.constant 0 : index
    %c0_8 = arith.constant 0 : index
    %8 = vector.load %arg5[%c0_7, %c0_8] : memref<16x32xf32, #tpu.memory_space<vmem>>, vector<16x32xf32>
    tpu.vector_store %arg5[%c0_7, %c0_8], %7 {strides = array<i32>} : memref<16x32xf32, #tpu.memory_space<vmem>>, vector<16x32xf32>,
    return
  }
  func.func @transform_0(%arg0: i32) -> (i32, i32) {
    %c0_i32 = arith.constant 0 : i32
    %c0_i32_0 = arith.constant 0 : i32
    return %arg0, %c0_i32 : i32, i32
  }
  func.func @transform_1(%arg0: i32) -> (i32, i32) {
    %c0_i32 = arith.constant 0 : i32
    %c0_i32_0 = arith.constant 0 : i32
    %c0_i32_1 = arith.constant 0 : i32
    return %c0_i32, %c0_i32_0 : i32, i32
  }
  func.func @transform_2(%arg0: i32) -> (i32, i32) {
    %c0_i32 = arith.constant 0 : i32
    %c0_i32_0 = arith.constant 0 : i32
    %c0_i32_1 = arith.constant 0 : i32
    return %c0_i32, %c0_i32_0 : i32, i32
  }
  func.func @transform_3(%arg0: i32) -> (i32, i32) {
    %c0_i32 = arith.constant 0 : i32
    %c0_i32_0 = arith.constant 0 : i32
    return %arg0, %c0_i32 : i32, i32
  }
  func.func @transform_4(%arg0: i32) -> (i32, i32) {
    %c0_i32 = arith.constant 0 : i32
    %c0_i32_0 = arith.constant 0 : i32
    return %arg0, %c0_i32 : i32, i32
  }
}

module attributes {stable_mosaic.version = 11 : i64} {
  func.func @_videomae_output_kernel(%arg0: i32, %arg1: memref<16x128xbf16, #tpu.memory_space<vmem>>, %arg2: memref<128x32xbf16, #tpu.memory_space<vmem>>, %arg3: memref<1x32xf32, #tpu.memory_space<vmem>>, %arg4: memref<16x32xf32, #tpu.memory_space<vmem>>, %arg5: memref<16x32xf32, #tpu.memory_space<vmem>>) attributes {dimension_semantics = [#tpu.dimension_semantics<parallel>], iteration_bounds = array<i64: 1>, scalar_prefetch = 0 : i64, scratch_operands = 0 : i64, tpu.core_type = #tpu.core_type<tc>, window_params = [{transform_indices = @transform_0, window_bounds = array<i64: 16, 128>}, {pipeline_mode = #tpu.pipeline_mode<synchronous>, transform_indices = @transform_1, window_bounds = array<i64: 128, 32>}, {pipeline_mode = #tpu.pipeline_mode<synchronous>, transform_indices = @transform_2, window_bounds = array<i64: 1, 32>}, {transform_indices = @transform_3, window_bounds = array<i64: 16, 32>}, {transform_indices = @transform_4, window_bounds = array<i64: 16, 32>}]} {
    %c0 = arith.constant 0 : index
    %c0_0 = arith.constant 0 : index
    %0 = vector.load %arg1[%c0, %c0_0] : memref<16x128xbf16, #tpu.memory_space<vmem>>, vector<16x128xbf16>
    %c0_1 = arith.constant 0 : index
    %c0_2 = arith.constant 0 : index
    %1 = vector.load %arg2[%c0_1, %c0_2] : memref<128x32xbf16, #tpu.memory_space<vmem>>, vector<128x32xbf16>
    %cst = arith.constant dense<0.000000e+00> : vector<16x32xf32>
    %2 = tpu.matmul %0, %1, %cst {dimension_numbers = #tpu.dot_dimension_numbers<[1], [0], [0], [1], [0, 0, 1, 1], [], []>} : vector<16x128xbf16>, vector<128x32xbf16>, vector<16x32xf32> -> vector<16x32xf32>
    %c0_3 = arith.constant 0 : index
    %c0_4 = arith.constant 0 : index
    %3 = vector.load %arg3[%c0_3, %c0_4] : memref<1x32xf32, #tpu.memory_space<vmem>>, vector<1x32xf32>
    %4 = vector.broadcast %3 : vector<1x32xf32> to vector<16x32xf32>
    %5 = arith.addf %2, %4 : vector<16x32xf32>
    %c0_5 = arith.constant 0 : index
    %c0_6 = arith.constant 0 : index
    %6 = vector.load %arg4[%c0_5, %c0_6] : memref<16x32xf32, #tpu.memory_space<vmem>>, vector<16x32xf32>
    %7 = arith.addf %5, %6 : vector<16x32xf32>
    %c0_7 = arith.constant 0 : index
    %c0_8 = arith.constant 0 : index
    %8 = vector.load %arg5[%c0_7, %c0_8] : memref<16x32xf32, #tpu.memory_space<vmem>>, vector<16x32xf32>
    tpu.vector_store %arg5[%c0_7, %c0_8], %7 {strides = array<i32>} : memref<16x32xf32, #tpu.memory_space<vmem>>, vector<16x32xf32>,
    return
  }
  func.func @transform_0(%arg0: i32) -> (i32, i32) {
    %c0_i32 = arith.constant 0 : i32
    %c0_i32_0 = arith.constant 0 : i32
    return %arg0, %c0_i32 : i32, i32
  }
  func.func @transform_1(%arg0: i32) -> (i32, i32) {
    %c0_i32 = arith.constant 0 : i32
    %c0_i32_0 = arith.constant 0 : i32
    %c0_i32_1 = arith.constant 0 : i32
    return %c0_i32, %c0_i32_0 : i32, i32
  }
  func.func @transform_2(%arg0: i32) -> (i32, i32) {
    %c0_i32 = arith.constant 0 : i32
    %c0_i32_0 = arith.constant 0 : i32
    %c0_i32_1 = arith.constant 0 : i32
    return %c0_i32, %c0_i32_0 : i32, i32
  }
  func.func @transform_3(%arg0: i32) -> (i32, i32) {
    %c0_i32 = arith.constant 0 : i32
    %c0_i32_0 = arith.constant 0 : i32
    return %arg0, %c0_i32 : i32, i32
  }
  func.func @transform_4(%arg0: i32) -> (i32, i32) {
    %c0_i32 = arith.constant 0 : i32
    %c0_i32_0 = arith.constant 0 : i32
    return %arg0, %c0_i32 : i32, i32
  }
}

</mosaic_0001>

<llo_original>
// kernel: tpu_custom_call.1
$region0: #{tpu_custom_call.1}
  #allocation0 [shape = 'u32[]', space=smem, size = 0x4, offset = 0x4, fixed_abs, tag = 'smem constant byte address 0x4 - core index']
  #allocation1 [shape = 'u32[72,128]{1,0:T(1,128)}', space=vmem, size = 0x9000, scoped, tag = 'internal scratch']
  %s0 = inlined_call_operand.vmem [shape: bf16[16,128], index: 0, kind: input, shape index: {}]
  %s1 = inlined_call_operand.vmem [shape: bf16[128,32], index: 1, kind: input, shape index: {}]
  %s2 = inlined_call_operand.vmem [shape: f32[1,32], index: 2, kind: input, shape index: {}]
  %s3 = inlined_call_operand.vmem [shape: f32[16,32], index: 3, kind: input, shape index: {}]
  %s4 = inlined_call_operand.hbm [shape: f32[16,32], index: 4, kind: output, shape index: {}]
  %s5 = sld [smem:[#allocation0]]
  $region26: #{tpu_custom_call.1} parent=0
    _
  %s7 = ssub.s32 1, %s5
  %s8 = scalar_select 0, %s7, %s5
  $region1: #{tpu_custom_call.1} parent=0
    #allocation2 [shape = 'u8[8192]{0}', space=vmem, size = 0x2000, scoped, tag = 'output window, operand 0, single buffered']
    #allocation3 [shape = 's32[1]{0}', space=sflag, size = 0x4, scoped, tag = 'scoped memory for tpu_custom_call.1']
    %9 = vsyncpa [#allocation3], 0
    // Predicated region
    $region2: #{tpu_custom_call.1} parent=1 // pred_check
      _
    $region3: #{tpu_custom_call.1} parent=1 // pred_check_branch
      %11 = sbr.rel (0) target = $region5
    $region4: #{tpu_custom_call.1} parent=1 // pred_region
      _
    $region5: #{tpu_custom_call.1} parent=1 // pred_fallthru
      _
    // Predicated region
    $region6: #{tpu_custom_call.1} parent=1 // pred_check
      _
    $region7: #{tpu_custom_call.1} parent=1 // pred_check_branch
      %13 = sbr.rel (0) target = $region9
    $region8: #{tpu_custom_call.1} parent=1 // pred_region
      _
    $region9: #{tpu_custom_call.1} parent=1 // pred_fallthru
      _
    // Predicated region
    $region10: #{tpu_custom_call.1} parent=1 // pred_check
      _
    $region11: #{tpu_custom_call.1} parent=1 // pred_check_branch
      %15 = sbr.rel (0) target = $region13
    $region12: #{tpu_custom_call.1} parent=1 // pred_region
      _
    $region13: #{tpu_custom_call.1} parent=1 // pred_fallthru
      _
    // Predicated region
    $region14: #{tpu_custom_call.1} parent=1 // pred_check
      _
    $region15: #{tpu_custom_call.1} parent=1 // pred_check_branch
      %17 = sbr.rel (0) target = $region17
    $region16: #{tpu_custom_call.1} parent=1 // pred_region
      _
    $region17: #{tpu_custom_call.1} parent=1 // pred_fallthru
      _
    %v18 = vld [vmem:[%s0] sm:$0xf]
    %v19 = vld [vmem:[%s0 + $0x4] sm:$0xf]
    %v20 = vld [vmem:[%s1] sm:$0xf]
    %v21 = vld [vmem:[%s1 + $0x4] sm:$0xf]
    %v22 = vld [vmem:[%s1 + $0x8] sm:$0xf]
    %v23 = vld [vmem:[%s1 + $0xc] sm:$0xf]
    %v24 = vld [vmem:[%s1 + $0x10] sm:$0xf]
    %v25 = vld [vmem:[%s1 + $0x14] sm:$0xf]
    %v26 = vld [vmem:[%s1 + $0x18] sm:$0xf]
    %v27 = vld [vmem:[%s1 + $0x1c] sm:$0xf]
    %v28 = vld [vmem:[%s1 + $0x20] sm:$0xf]
    %v29 = vld [vmem:[%s1 + $0x24] sm:$0xf]
    %v30 = vld [vmem:[%s1 + $0x28] sm:$0xf]
    %v31 = vld [vmem:[%s1 + $0x2c] sm:$0xf]
    %v32 = vld [vmem:[%s1 + $0x30] sm:$0xf]
    %v33 = vld [vmem:[%s1 + $0x34] sm:$0xf]
    %v34 = vld [vmem:[%s1 + $0x38] sm:$0xf]
    %v35 = vld [vmem:[%s1 + $0x3c] sm:$0xf]
    %v36 = vld [vmem:[%s2] sm:$0x1]
    %v38 = vperm.slane %v36, 0
    %v42 = vunpack.c.l.b16 %v18
    %v43 = vunpack.c.l.b16 %v19
    %v44 = vpack.c.b16 %v43, %v42
    %v62 = vunpack.c.l.b16 %v20
    %v63 = vunpack.c.l.b16 %v21
    %v64 = vunpack.c.l.b16 %v22
    %v65 = vunpack.c.l.b16 %v23
    %v66 = vunpack.c.l.b16 %v24
    %v67 = vunpack.c.l.b16 %v25
    %v68 = vunpack.c.l.b16 %v26
    %v69 = vunpack.c.l.b16 %v27
    %v70 = vunpack.c.l.b16 %v28
    %v71 = vunpack.c.l.b16 %v29
    %v72 = vunpack.c.l.b16 %v30
    %v73 = vunpack.c.l.b16 %v31
    %v74 = vunpack.c.l.b16 %v32
    %v75 = vunpack.c.l.b16 %v33
    %v76 = vunpack.c.l.b16 %v34
    %v77 = vunpack.c.l.b16 %v35
    %v78 = vpack.c.b16 %v63, %v62
    %v79 = vpack.c.b16 %v65, %v64
    %v80 = vpack.c.b16 %v67, %v66
    %v81 = vpack.c.b16 %v69, %v68
    %v82 = vpack.c.b16 %v71, %v70
    %v83 = vpack.c.b16 %v73, %v72
    %v84 = vpack.c.b16 %v75, %v74
    %v85 = vpack.c.b16 %v77, %v76
    %94 = vmatpush.bf16.msra.mxu0 %v85
    %95 = vmatpush.bf16.msra.mxu0 %v84
    %96 = vmatpush.bf16.msra.mxu0 %v83
    %97 = vmatpush.bf16.msra.mxu0 %v82
    %98 = vmatpush.bf16.msra.mxu0 %v81
    %99 = vmatpush.bf16.msra.mxu0 %v80
    %100 = vmatpush.bf16.msra.mxu0 %v79
    %101 = vmatpush.bf16.msra.mxu0 %v78
    %102 = vmatmul.bf16.gmra.mxu0 %v44
    %v103 = vpop.f32.mrf.mxu0
    %v104 = vadd.f32 %v38, %v103
    %v105 = vpop.f32.mrf.mxu0
    %v106 = vadd.f32 %v38, %v105
    %107 = vdwg.mxu0
    %v108 = vld [vmem:[%s3] sm:$0xff]
    %v109 = vld [vmem:[%s3 + $0x8] sm:$0xff]
    %v110 = vadd.f32 %v104, %v108
    %v111 = vadd.f32 %v106, %v109
    %vm112 = vcmask 261120
    %113 = vst.msk [vmem:[#allocation2] sm:$0xff] %vm112, %v110
    %114 = vst.msk [vmem:[#allocation2 + $0x8] sm:$0xff] %vm112, %v111
    // Predicated region
    $region18: #{tpu_custom_call.1} parent=1 // pred_check
      _
    $region19: #{tpu_custom_call.1} parent=1 // pred_check_branch
      %116 = sbr.rel (0) target = $region21
    $region20: #{tpu_custom_call.1} parent=1 // pred_region
      %118 = vsyncadd [#allocation3], 0
      %s119 = sshll.u32 [#allocation2], 4
      %s120 = int_to_ptr.vmem [resolvable:$true] %s119
      %s121 = sshll.u32 %s4, 4
      %s122 = int_to_ptr.hbm [resolvable:$true] %s121
      %127 = dma.vmem_to_hbm [thread:$0]  %s120, 256, %s122, [#allocation3], 128, 128, 8
    $region21: #{tpu_custom_call.1} parent=1 // pred_fallthru
      _
    // Predicated region
    $region22: #{tpu_custom_call.1} parent=1 // pred_check
      _
    $region23: #{tpu_custom_call.1} parent=1 // pred_check_branch
      %129 = sbr.rel (0) target = $region25
    $region24: #{tpu_custom_call.1} parent=1 // pred_region
      %131 = dma.done [#allocation3], 256
    $region25: #{tpu_custom_call.1} parent=1 // pred_fallthru
      _
    %132 = vsyncpa [#allocation3], 1

// kernel: tpu_custom_call.1
$region0: #{tpu_custom_call.1}
  #allocation0 [shape = 'u32[]', space=smem, size = 0x4, offset = 0x4, fixed_abs, tag = 'smem constant byte address 0x4 - core index']
  #allocation1 [shape = 'u32[72,128]{1,0:T(1,128)}', space=vmem, size = 0x9000, scoped, tag = 'internal scratch']
  %s0 = inlined_call_operand.vmem [shape: bf16[16,128], index: 0, kind: input, shape index: {}]
  %s1 = inlined_call_operand.vmem [shape: bf16[128,32], index: 1, kind: input, shape index: {}]
  %s2 = inlined_call_operand.vmem [shape: f32[1,32], index: 2, kind: input, shape index: {}]
  %s3 = inlined_call_operand.vmem [shape: f32[16,32], index: 3, kind: input, shape index: {}]
  %s4 = inlined_call_operand.hbm [shape: f32[16,32], index: 4, kind: output, shape index: {}]
  %s5 = sld [smem:[#allocation0]]
  $region26: #{tpu_custom_call.1} parent=0
    _
  %s7 = ssub.s32 1, %s5
  %s8 = scalar_select 0, %s7, %s5
  $region1: #{tpu_custom_call.1} parent=0
    #allocation2 [shape = 'u8[8192]{0}', space=vmem, size = 0x2000, scoped, tag = 'output window, operand 0, single buffered']
    #allocation3 [shape = 's32[1]{0}', space=sflag, size = 0x4, scoped, tag = 'scoped memory for tpu_custom_call.1']
    %9 = vsyncpa [#allocation3], 0
    // Predicated region
    $region2: #{tpu_custom_call.1} parent=1 // pred_check
      _
    $region3: #{tpu_custom_call.1} parent=1 // pred_check_branch
      %11 = sbr.rel (0) target = $region5
    $region4: #{tpu_custom_call.1} parent=1 // pred_region
      _
    $region5: #{tpu_custom_call.1} parent=1 // pred_fallthru
      _
    // Predicated region
    $region6: #{tpu_custom_call.1} parent=1 // pred_check
      _
    $region7: #{tpu_custom_call.1} parent=1 // pred_check_branch
      %13 = sbr.rel (0) target = $region9
    $region8: #{tpu_custom_call.1} parent=1 // pred_region
      _
    $region9: #{tpu_custom_call.1} parent=1 // pred_fallthru
      _
    // Predicated region
    $region10: #{tpu_custom_call.1} parent=1 // pred_check
      _
    $region11: #{tpu_custom_call.1} parent=1 // pred_check_branch
      %15 = sbr.rel (0) target = $region13
    $region12: #{tpu_custom_call.1} parent=1 // pred_region
      _
    $region13: #{tpu_custom_call.1} parent=1 // pred_fallthru
      _
    // Predicated region
    $region14: #{tpu_custom_call.1} parent=1 // pred_check
      _
    $region15: #{tpu_custom_call.1} parent=1 // pred_check_branch
      %17 = sbr.rel (0) target = $region17
    $region16: #{tpu_custom_call.1} parent=1 // pred_region
      _
    $region17: #{tpu_custom_call.1} parent=1 // pred_fallthru
      _
    %v18 = vld [vmem:[%s0] sm:$0xf]
    %v19 = vld [vmem:[%s0 + $0x4] sm:$0xf]
    %v20 = vld [vmem:[%s1] sm:$0xf]
    %v21 = vld [vmem:[%s1 + $0x4] sm:$0xf]
    %v22 = vld [vmem:[%s1 + $0x8] sm:$0xf]
    %v23 = vld [vmem:[%s1 + $0xc] sm:$0xf]
    %v24 = vld [vmem:[%s1 + $0x10] sm:$0xf]
    %v25 = vld [vmem:[%s1 + $0x14] sm:$0xf]
    %v26 = vld [vmem:[%s1 + $0x18] sm:$0xf]
    %v27 = vld [vmem:[%s1 + $0x1c] sm:$0xf]
    %v28 = vld [vmem:[%s1 + $0x20] sm:$0xf]
    %v29 = vld [vmem:[%s1 + $0x24] sm:$0xf]
    %v30 = vld [vmem:[%s1 + $0x28] sm:$0xf]
    %v31 = vld [vmem:[%s1 + $0x2c] sm:$0xf]
    %v32 = vld [vmem:[%s1 + $0x30] sm:$0xf]
    %v33 = vld [vmem:[%s1 + $0x34] sm:$0xf]
    %v34 = vld [vmem:[%s1 + $0x38] sm:$0xf]
    %v35 = vld [vmem:[%s1 + $0x3c] sm:$0xf]
    %v36 = vld [vmem:[%s2] sm:$0x1]
    %v38 = vperm.slane %v36, 0
    %v42 = vunpack.c.l.b16 %v18
    %v43 = vunpack.c.l.b16 %v19
    %v44 = vpack.c.b16 %v43, %v42
    %v62 = vunpack.c.l.b16 %v20
    %v63 = vunpack.c.l.b16 %v21
    %v64 = vunpack.c.l.b16 %v22
    %v65 = vunpack.c.l.b16 %v23
    %v66 = vunpack.c.l.b16 %v24
    %v67 = vunpack.c.l.b16 %v25
    %v68 = vunpack.c.l.b16 %v26
    %v69 = vunpack.c.l.b16 %v27
    %v70 = vunpack.c.l.b16 %v28
    %v71 = vunpack.c.l.b16 %v29
    %v72 = vunpack.c.l.b16 %v30
    %v73 = vunpack.c.l.b16 %v31
    %v74 = vunpack.c.l.b16 %v32
    %v75 = vunpack.c.l.b16 %v33
    %v76 = vunpack.c.l.b16 %v34
    %v77 = vunpack.c.l.b16 %v35
    %v78 = vpack.c.b16 %v63, %v62
    %v79 = vpack.c.b16 %v65, %v64
    %v80 = vpack.c.b16 %v67, %v66
    %v81 = vpack.c.b16 %v69, %v68
    %v82 = vpack.c.b16 %v71, %v70
    %v83 = vpack.c.b16 %v73, %v72
    %v84 = vpack.c.b16 %v75, %v74
    %v85 = vpack.c.b16 %v77, %v76
    %94 = vmatpush.bf16.msra.mxu0 %v85
    %95 = vmatpush.bf16.msra.mxu0 %v84
    %96 = vmatpush.bf16.msra.mxu0 %v83
    %97 = vmatpush.bf16.msra.mxu0 %v82
    %98 = vmatpush.bf16.msra.mxu0 %v81
    %99 = vmatpush.bf16.msra.mxu0 %v80
    %100 = vmatpush.bf16.msra.mxu0 %v79
    %101 = vmatpush.bf16.msra.mxu0 %v78
    %102 = vmatmul.bf16.gmra.mxu0 %v44
    %v103 = vpop.f32.mrf.mxu0
    %v104 = vadd.f32 %v38, %v103
    %v105 = vpop.f32.mrf.mxu0
    %v106 = vadd.f32 %v38, %v105
    %107 = vdwg.mxu0
    %v108 = vld [vmem:[%s3] sm:$0xff]
    %v109 = vld [vmem:[%s3 + $0x8] sm:$0xff]
    %v110 = vadd.f32 %v104, %v108
    %v111 = vadd.f32 %v106, %v109
    %vm112 = vcmask 261120
    %113 = vst.msk [vmem:[#allocation2] sm:$0xff] %vm112, %v110
    %114 = vst.msk [vmem:[#allocation2 + $0x8] sm:$0xff] %vm112, %v111
    // Predicated region
    $region18: #{tpu_custom_call.1} parent=1 // pred_check
      _
    $region19: #{tpu_custom_call.1} parent=1 // pred_check_branch
      %116 = sbr.rel (0) target = $region21
    $region20: #{tpu_custom_call.1} parent=1 // pred_region
      %118 = vsyncadd [#allocation3], 0
      %s119 = sshll.u32 [#allocation2], 4
      %s120 = int_to_ptr.vmem [resolvable:$true] %s119
      %s121 = sshll.u32 %s4, 4
      %s122 = int_to_ptr.hbm [resolvable:$true] %s121
      %127 = dma.vmem_to_hbm [thread:$0]  %s120, 256, %s122, [#allocation3], 128, 128, 8
    $region21: #{tpu_custom_call.1} parent=1 // pred_fallthru
      _
    // Predicated region
    $region22: #{tpu_custom_call.1} parent=1 // pred_check
      _
    $region23: #{tpu_custom_call.1} parent=1 // pred_check_branch
      %129 = sbr.rel (0) target = $region25
    $region24: #{tpu_custom_call.1} parent=1 // pred_region
      %131 = dma.done [#allocation3], 256
    $region25: #{tpu_custom_call.1} parent=1 // pred_fallthru
      _
    %132 = vsyncpa [#allocation3], 1

</llo_original>
